<compile_context>
chip_gen: v6e
topology: v6e:2x2x1
jax: 0.10.0
libtpu: 0.0.40
codegen_flags: <defaults>
</compile_context>

<pallas_src>
import functools
import numpy as np
import jax
import jax.numpy as jnp
from jax.experimental import pallas as pl
from jax.experimental.pallas import tpu as pltpu


# ----------------------------------------------------------------------------
# Parameter construction (deterministic, mirrors Renderer.__init__ for 'cqt')
# ----------------------------------------------------------------------------
def build_r_filter(num_harmony=20,
                   feature_type='cqt',
                   n_bins=84,
                   bins_per_octave=12,
                   fmin=None,
                   init_sigma=10.0,
                   init_omega=1.0):
    if feature_type != 'cqt':
        # TODO(synk): stft/mel bin-frequency grids (librosa mel math) not needed here.
        raise NotImplementedError("this script builds the cqt-bin filter only")
    if fmin is None:
        fmin = 32.7
    # frequencies of each output bin
    frs = fmin * np.power(2.0, np.arange(n_bins) / bins_per_octave)        # [F]
    # MIDI note 0..127 fundamental frequencies
    frs_input = 440.0 * np.power(2.0, (np.arange(128) - 69) / 12.0)        # [128]

    F = frs.shape[0]
    P = frs_input.shape[0]
    frs_b = np.broadcast_to(frs[:, None, None], (F, P, num_harmony))
    frs_in_b = np.broadcast_to(frs_input[None, :, None], (F, P, num_harmony))
    harm = np.arange(1, 1 + num_harmony)[None, None, :]                    # [1,1,H]

    sigmas = init_sigma * np.ones(num_harmony)
    omegas = init_omega * np.ones(num_harmony)

    r = omegas * np.exp(-((frs_b - harm * frs_in_b) ** 2) / (2.0 * sigmas ** 2))
    r_filter = np.sum(r, axis=-1).astype(np.float32)                       # [F,128]
    return jnp.asarray(r_filter)


def prepare_filter(r_filter):
    """One-time precompute: transpose to [128, F] so the kernel is a plain GEMM."""
    return jnp.asarray(r_filter.T)                                         # [128, F]


# ----------------------------------------------------------------------------
# Helpers
# ----------------------------------------------------------------------------
def _pick_precision():
    """HIGHEST everywhere except v5e, where the 6-pass f32 emulation would make
    the kernel MXU-bound (review: drop to HIGH = bf16_3x on v5e)."""
    try:
        kind = jax.devices()[0].device_kind.lower()
    except Exception:
        return jax.lax.Precision.HIGHEST
    if 'v5e' in kind or 'v5 lite' in kind or 'v5lite' in kind:
        return jax.lax.Precision.HIGH
    return jax.lax.Precision.HIGHEST


def _round_up(x, m):
    return ((x + m - 1) // m) * m


def _choose_tm(M, tm_max=4096):
    """Row-tile size: big (amortize per-grid-step overhead), multiple of 8
    (or the full extent), and for large problems at least 2 grid blocks so
    both v7x TensorCores get work."""
    if M <= 1024:
        # Small problem: single block, full extent (always a legal block shape).
        return M
    half = _round_up((M + 1) // 2, 8)       # ceil(M/2) rounded to sublane multiple
    return min(tm_max, half)                 # tm_max and `half` are multiples of 8


# ----------------------------------------------------------------------------
# Pallas kernel: out[m, f] = sum_{p<128} pitches[m, p] * w[p, f]
# ----------------------------------------------------------------------------
def _render_kernel(p_ref, w_ref, o_ref, *, precision):
    # p_ref: [tm, 128]  (lanes 0..127 only -- the :128 slice lives in the BlockSpec)
    # w_ref: [128, F]   (constant index_map -> resident in VMEM across grid steps)
    # o_ref: [tm, F]    (written directly; no post-kernel slice / extra HBM pass)
    o_ref[...] = jnp.dot(p_ref[...], w_ref[...],
                         preferred_element_type=jnp.float32,
                         precision=precision)


def render(pitches, w, *, precision=None, tm_max=4096):
    """pitches: [..., T, P>=128] float32; w: [128, F]. Returns [..., T, F]."""
    *lead, P = pitches.shape
    assert P >= 128, "Renderer requires at least 128 pitch bins (MIDI range)"
    K, F = w.shape                                         # K == 128
    assert K == 128

    if precision is None:
        precision = _pick_precision()

    M = 1
    for d in lead:
        M *= int(d)
    x = pitches.reshape(M, P)                              # free (contiguous) reshape

    tm = _choose_tm(M, tm_max)
    grid = (pl.cdiv(M, tm),)

    kernel = functools.partial(_render_kernel, precision=precision)

    out = pl.pallas_call(
        kernel,
        out_shape=jax.ShapeDtypeStruct((M, F), jnp.float32),
        grid_spec=pltpu.PrefetchScalarGridSpec(
            num_scalar_prefetch=0,
            grid=grid,
            in_specs=[
                # Exactly 128 lanes of the pitch rows per grid step: legal block
                # (128 % 128 == 0) and it never touches lanes >= 128.
                pl.BlockSpec((tm, 128), lambda i: (i, 0)),
                # Filter block is identical every step -> stays resident in VMEM.
                pl.BlockSpec((K, F), lambda i: (0, 0)),
            ],
            out_specs=pl.BlockSpec((tm, F), lambda i: (i, 0)),
        ),
        compiler_params=pltpu.CompilerParams(
            dimension_semantics=("parallel",)),
        cost_estimate=pl.CostEstimate(
            # Advisory only (ignores the pass multiplier of HIGHEST precision).
            flops=2 * M * 128 * F,
            transcendentals=0,
            bytes_accessed=4 * (M * 128 + K * F + M * F)),
    )(x, w)

    return out.reshape(*lead, F)


# ----------------------------------------------------------------------------
# Main
# ----------------------------------------------------------------------------
if __name__ == "__main__":
    key = jax.random.PRNGKey(0)

    # Small shapes: batch=2, time=8, pitch dim=130 (>128 to exercise the slice).
    B, T, P = 2, 8, 130
    pitches = jax.random.uniform(key, (B, T, P), dtype=jnp.float32)

    r_filter = build_r_filter(num_harmony=20, feature_type='cqt', n_bins=84)
    w = prepare_filter(r_filter)                           # one-time precompute
    F = w.shape[1]

    out = render(pitches, w)
    out = jax.block_until_ready(out)

    # Reference check (pure JAX, mirrors the PyTorch forward exactly).
    ref = jnp.einsum('btp,fp->btf', pitches[..., :128], r_filter,
                     precision=jax.lax.Precision.HIGHEST)

    # Tolerance depends on the chip-selected matmul precision.
    tol = 1e-5 if _pick_precision() == jax.lax.Precision.HIGHEST else 1e-4
    np.testing.assert_allclose(np.asarray(out), np.asarray(ref),
                               rtol=tol, atol=tol)

    assert out.shape == (B, T, F)
    print("KERNEL_OK")
</pallas_src>

<mosaic_0001>
module attributes {stable_mosaic.version = 11 : i64} {
  func.func @_render_kernel(%arg0: i32, %arg1: memref<16x128xf32, #tpu.memory_space<vmem>>, %arg2: memref<128x84xf32, #tpu.memory_space<vmem>>, %arg3: memref<16x84xf32, #tpu.memory_space<vmem>>) attributes {dimension_semantics = [#tpu.dimension_semantics<parallel>], iteration_bounds = array<i64: 1>, scalar_prefetch = 0 : i64, scratch_operands = 0 : i64, tpu.core_type = #tpu.core_type<tc>, window_params = [{transform_indices = @transform_0, window_bounds = array<i64: 16, 128>}, {pipeline_mode = #tpu.pipeline_mode<synchronous>, transform_indices = @transform_1, window_bounds = array<i64: 128, 84>}, {transform_indices = @transform_2, window_bounds = array<i64: 16, 84>}]} {
    %c0 = arith.constant 0 : index
    %c0_0 = arith.constant 0 : index
    %0 = vector.load %arg1[%c0, %c0_0] : memref<16x128xf32, #tpu.memory_space<vmem>>, vector<16x128xf32>
    %c0_1 = arith.constant 0 : index
    %c0_2 = arith.constant 0 : index
    %1 = vector.load %arg2[%c0_1, %c0_2] : memref<128x84xf32, #tpu.memory_space<vmem>>, vector<128x84xf32>
    %cst = arith.constant dense<0.000000e+00> : vector<16x84xf32>
    %2 = tpu.matmul %0, %1, %cst {dimension_numbers = #tpu.dot_dimension_numbers<[1], [0], [0], [1], [0, 0, 1, 1], [], []>, precision = #tpu.contract_precision<fp32>} : vector<16x128xf32>, vector<128x84xf32>, vector<16x84xf32> -> vector<16x84xf32>
    %c0_3 = arith.constant 0 : index
    %c0_4 = arith.constant 0 : index
    %3 = vector.load %arg3[%c0_3, %c0_4] : memref<16x84xf32, #tpu.memory_space<vmem>>, vector<16x84xf32>
    tpu.vector_store %arg3[%c0_3, %c0_4], %2 {strides = array<i32>} : memref<16x84xf32, #tpu.memory_space<vmem>>, vector<16x84xf32>,
    return
  }
  func.func @transform_0(%arg0: i32) -> (i32, i32) {
    %c0_i32 = arith.constant 0 : i32
    %c0_i32_0 = arith.constant 0 : i32
    return %arg0, %c0_i32 : i32, i32
  }
  func.func @transform_1(%arg0: i32) -> (i32, i32) {
    %c0_i32 = arith.constant 0 : i32
    %c0_i32_0 = arith.constant 0 : i32
    %c0_i32_1 = arith.constant 0 : i32
    return %c0_i32, %c0_i32_0 : i32, i32
  }
  func.func @transform_2(%arg0: i32) -> (i32, i32) {
    %c0_i32 = arith.constant 0 : i32
    %c0_i32_0 = arith.constant 0 : i32
    return %arg0, %c0_i32 : i32, i32
  }
}

</mosaic_0001>

<llo_original>
// kernel: tpu_custom_call.1
$region0: #{tpu_custom_call.1}
  #allocation0 [shape = 'u32[]', space=smem, size = 0x4, offset = 0x4, fixed_abs, tag = 'smem constant byte address 0x4 - core index']
  #allocation1 [shape = 'u32[144,128]{1,0:T(1,128)}', space=vmem, size = 0x12000, scoped, tag = 'internal scratch']
  %s0 = inlined_call_operand.vmem [shape: f32[16,130], index: 0, kind: input, shape index: {}]
  %s1 = inlined_call_operand.vmem [shape: f32[128,84], index: 1, kind: input, shape index: {}]
  %s2 = inlined_call_operand.hbm [shape: f32[16,84], index: 2, kind: output, shape index: {}]
  %s3 = sld [smem:[#allocation0]]
  $region56: #{tpu_custom_call.1} parent=0
    _
  %s5 = ssub.s32 1, %s3
  %s6 = scalar_select 0, %s5, %s3
  $region1: #{tpu_custom_call.1} parent=0
    #allocation2 [shape = 'u8[8192]{0}', space=vmem, size = 0x2000, scoped, tag = 'input window, operand 0, single buffered']
    #allocation3 [shape = 'u8[8192]{0}', space=vmem, size = 0x2000, scoped, tag = 'output window, operand 0, single buffered']
    #allocation4 [shape = 's32[1]{0}', space=sflag, size = 0x4, scoped, tag = 'scoped memory for tpu_custom_call.1']
    %7 = vsyncpa [#allocation4], 0
    // Predicated region
    $region2: #{tpu_custom_call.1} parent=1 // pred_check
      _
    $region3: #{tpu_custom_call.1} parent=1 // pred_check_branch
      %9 = sbr.rel (0) target = $region5
    $region4: #{tpu_custom_call.1} parent=1 // pred_region
      // Predicated region
      $region6: #{tpu_custom_call.1} parent=4 // pred_check
        _
      $region7: #{tpu_custom_call.1} parent=4 // pred_check_branch
        %11 = sbr.rel (0) target = $region9
      $region8: #{tpu_custom_call.1} parent=4 // pred_region
        // Predicated region
        $region10: #{tpu_custom_call.1} parent=8 // pred_check
          _
        $region11: #{tpu_custom_call.1} parent=8 // pred_check_branch
          %13 = sbr.rel (0) target = $region13
        $region12: #{tpu_custom_call.1} parent=8 // pred_region
          // Predicated region
          $region25: #{tpu_custom_call.1} parent=12 // pred_check
            _
          $region26: #{tpu_custom_call.1} parent=12 // pred_check_branch
            %31 = sbr.rel (0) target = $region28
          $region27: #{tpu_custom_call.1} parent=12 // pred_region
            loop: start=0, step=1, limit=1
            $region29: #{tpu_custom_call.1} parent=27 // loop_pre_header
              _
            $region30: #{tpu_custom_call.1} parent=27 // loop_header
              %s33 = sphi 0, %s37
              %p34 = scmp.ge.s32.totalorder %s33, 1
              %s38 = sphi %s0, %s0
              %s39 = sphi [#allocation2], [#allocation2]
            $region31: #{tpu_custom_call.1} parent=27 // loop_header_branch
              %36 = sbr.rel (%p34) target = $region35
            $region32: #{tpu_custom_call.1} parent=27 // loop_body
              %v40 = vld [vmem:[%s38] sm:$0xff]
              %41 = vst [vmem:[%s39] sm:$0xff] %v40
              %v42 = vld [vmem:[%s38 + $0x10] sm:$0xff]
              %43 = vst [vmem:[%s39 + $0x8] sm:$0xff] %v42
            $region33: #{tpu_custom_call.1} parent=27 // loop_footer
              %s37 = sadd.s32 1, %s33
            $region34: #{tpu_custom_call.1} parent=27 // loop_footer_branch
              %32 = sbr.rel target = $region30
            $region35: #{tpu_custom_call.1} parent=27 // loop_exit
              _
          $region28: #{tpu_custom_call.1} parent=12 // pred_fallthru
            _
          // Predicated region
          $region36: #{tpu_custom_call.1} parent=12 // pred_check
            _
          $region37: #{tpu_custom_call.1} parent=12 // pred_check_branch
            %45 = sbr.rel target = $region39
          $region38: #{tpu_custom_call.1} parent=12 // pred_region
            _
          $region39: #{tpu_custom_call.1} parent=12 // pred_fallthru
            _
        $region13: #{tpu_custom_call.1} parent=8 // pred_fallthru
          _
        // Predicated region
        $region14: #{tpu_custom_call.1} parent=8 // pred_check
          _
        $region15: #{tpu_custom_call.1} parent=8 // pred_check_branch
          %15 = sbr.rel target = $region17
        $region16: #{tpu_custom_call.1} parent=8 // pred_region
          %s17 = ssub.s32 256, 1
          loop: start=0, step=1, limit=1
          $region18: #{tpu_custom_call.1} parent=16 // loop_pre_header
            _
          $region19: #{tpu_custom_call.1} parent=16 // loop_header
            %s19 = sphi 0, %s23
            %p20 = scmp.ge.s32.totalorder %s19, 1
            %s24 = sphi %s0, %s0
            %s25 = sphi [#allocation2], [#allocation2]
          $region20: #{tpu_custom_call.1} parent=16 // loop_header_branch
            %22 = sbr.rel (%p20) target = $region24
          $region21: #{tpu_custom_call.1} parent=16 // loop_body
            %v26 = vld [vmem:[%s24] sm:%s17]
            %27 = vst [vmem:[%s25] sm:%s17] %v26
            %v28 = vld [vmem:[%s24 + $0x10] sm:%s17]
            %29 = vst [vmem:[%s25 + $0x8] sm:%s17] %v28
          $region22: #{tpu_custom_call.1} parent=16 // loop_footer
            %s23 = sadd.s32 1, %s19
          $region23: #{tpu_custom_call.1} parent=16 // loop_footer_branch
            %18 = sbr.rel target = $region19
          $region24: #{tpu_custom_call.1} parent=16 // loop_exit
            _
        $region17: #{tpu_custom_call.1} parent=8 // pred_fallthru
          _
      $region9: #{tpu_custom_call.1} parent=4 // pred_fallthru
        _
      %46 = vnop
    $region5: #{tpu_custom_call.1} parent=1 // pred_fallthru
      _
    // Predicated region
    $region40: #{tpu_custom_call.1} parent=1 // pred_check
      _
    $region41: #{tpu_custom_call.1} parent=1 // pred_check_branch
      %48 = sbr.rel (0) target = $region43
    $region42: #{tpu_custom_call.1} parent=1 // pred_region
      _
    $region43: #{tpu_custom_call.1} parent=1 // pred_fallthru
      _
    // Predicated region
    $region44: #{tpu_custom_call.1} parent=1 // pred_check
      _
    $region45: #{tpu_custom_call.1} parent=1 // pred_check_branch
      %50 = sbr.rel (0) target = $region47
    $region46: #{tpu_custom_call.1} parent=1 // pred_region
      _
    $region47: #{tpu_custom_call.1} parent=1 // pred_fallthru
      _
    %v51 = vld [vmem:[#allocation2] sm:$0xff]
    %v52 = vld [vmem:[#allocation2 + $0x8] sm:$0xff]
    %v53 = vld [vmem:[%s1] sm:$0xff]
    %v54 = vld [vmem:[%s1 + $0x8] sm:$0xff]
    %v55 = vld [vmem:[%s1 + $0x10] sm:$0xff]
    %v56 = vld [vmem:[%s1 + $0x18] sm:$0xff]
    %v57 = vld [vmem:[%s1 + $0x20] sm:$0xff]
    %v58 = vld [vmem:[%s1 + $0x28] sm:$0xff]
    %v59 = vld [vmem:[%s1 + $0x30] sm:$0xff]
    %v60 = vld [vmem:[%s1 + $0x38] sm:$0xff]
    %v61 = vld [vmem:[%s1 + $0x40] sm:$0xff]
    %v62 = vld [vmem:[%s1 + $0x48] sm:$0xff]
    %v63 = vld [vmem:[%s1 + $0x50] sm:$0xff]
    %v64 = vld [vmem:[%s1 + $0x58] sm:$0xff]
    %v65 = vld [vmem:[%s1 + $0x60] sm:$0xff]
    %v66 = vld [vmem:[%s1 + $0x68] sm:$0xff]
    %v67 = vld [vmem:[%s1 + $0x70] sm:$0xff]
    %v68 = vld [vmem:[%s1 + $0x78] sm:$0xff]
    %69 = vmatprep.subr.mxu0 0.0
    %v70 = vand.u32 %v68, 4294901760
    %71 = vmatpush1.msra.mxu0 %v70
    %72 = vmatprep.subr.mxu0 0.0
    %v73 = vand.u32 %v67, 4294901760
    %74 = vmatpush1.msra.mxu0 %v73
    %75 = vmatprep.subr.mxu0 0.0
    %v76 = vand.u32 %v66, 4294901760
    %77 = vmatpush1.msra.mxu0 %v76
    %78 = vmatprep.subr.mxu0 0.0
    %v79 = vand.u32 %v65, 4294901760
    %80 = vmatpush1.msra.mxu0 %v79
    %81 = vmatprep.subr.mxu0 0.0
    %v82 = vand.u32 %v64, 4294901760
    %83 = vmatpush1.msra.mxu0 %v82
    %84 = vmatprep.subr.mxu0 0.0
    %v85 = vand.u32 %v63, 4294901760
    %86 = vmatpush1.msra.mxu0 %v85
    %87 = vmatprep.subr.mxu0 0.0
    %v88 = vand.u32 %v62, 4294901760
    %89 = vmatpush1.msra.mxu0 %v88
    %90 = vmatprep.subr.mxu0 0.0
    %v91 = vand.u32 %v61, 4294901760
    %92 = vmatpush1.msra.mxu0 %v91
    %93 = vmatprep.subr.mxu0 0.0
    %v94 = vand.u32 %v60, 4294901760
    %95 = vmatpush1.msra.mxu0 %v94
    %96 = vmatprep.subr.mxu0 0.0
    %v97 = vand.u32 %v59, 4294901760
    %98 = vmatpush1.msra.mxu0 %v97
    %99 = vmatprep.subr.mxu0 0.0
    %v100 = vand.u32 %v58, 4294901760
    %101 = vmatpush1.msra.mxu0 %v100
    %102 = vmatprep.subr.mxu0 0.0
    %v103 = vand.u32 %v57, 4294901760
    %104 = vmatpush1.msra.mxu0 %v103
    %105 = vmatprep.subr.mxu0 0.0
    %v106 = vand.u32 %v56, 4294901760
    %107 = vmatpush1.msra.mxu0 %v106
    %108 = vmatprep.subr.mxu0 0.0
    %v109 = vand.u32 %v55, 4294901760
    %110 = vmatpush1.msra.mxu0 %v109
    %111 = vmatprep.subr.mxu0 0.0
    %v112 = vand.u32 %v54, 4294901760
    %113 = vmatpush1.msra.mxu0 %v112
    %114 = vmatprep.subr.mxu0 0.0
    %v115 = vand.u32 %v53, 4294901760
    %116 = vmatpush1.msra.mxu0 %v115
    %117 = vmatprep.subr.mxu0 0.0
    %118 = vmatpush2.msra.mxu0 0.0
    %119 = vmatprep.subr.mxu0 0.0
    %120 = vmatpush2.msra.mxu0 0.0
    %121 = vmatprep.subr.mxu0 0.0
    %122 = vmatpush2.msra.mxu0 0.0
    %123 = vmatprep.subr.mxu0 0.0
    %124 = vmatpush2.msra.mxu0 0.0
    %125 = vmatprep.subr.mxu0 0.0
    %126 = vmatpush2.msra.mxu0 0.0
    %127 = vmatprep.subr.mxu0 0.0
    %128 = vmatpush2.msra.mxu0 0.0
    %129 = vmatprep.subr.mxu0 0.0
    %130 = vmatpush2.msra.mxu0 0.0
    %131 = vmatprep.subr.mxu0 0.0
    %132 = vmatpush2.msra.mxu0 0.0
    %133 = vmatprep.subr.mxu0 0.0
    %134 = vmatpush2.msra.mxu0 0.0
    %135 = vmatprep.subr.mxu0 0.0
    %136 = vmatpush2.msra.mxu0 0.0
    %137 = vmatprep.subr.mxu0 0.0
    %138 = vmatpush2.msra.mxu0 0.0
    %139 = vmatprep.subr.mxu0 0.0
    %140 = vmatpush2.msra.mxu0 0.0
    %141 = vmatprep.subr.mxu0 0.0
    %142 = vmatpush2.msra.mxu0 0.0
    %143 = vmatprep.subr.mxu0 0.0
    %144 = vmatpush2.msra.mxu0 0.0
    %145 = vmatprep.subr.mxu0 0.0
    %146 = vmatpush2.msra.mxu0 0.0
    %147 = vmatprep.subr.mxu0 0.0
    %148 = vmatpush2.msra.mxu0 0.0
    %149 = vmatprep.mubr.f32.mxu0 0.0
    %v150 = vand.u32 %v51, 4294901760
    %v151 = vsub.f32 %v51, %v150
    %v152 = vand.u32 %v151, 4294901760
    %v153 = vsub.f32 %v151, %v152
    %v154 = vand.u32 %v153, 4294901760
    %155 = vmatmul.mubr.f32.gmra.mxu0 %v154
    %v156 = vpop.f32.mrf.mxu0
    %v157 = vadd.f32 0.0, %v156
    %v158 = vpop.f32.mrf.mxu0
    %159 = vmatprep.mubr.f32.mxu0 0.0
    %v160 = vand.u32 %v52, 4294901760
    %v161 = vsub.f32 %v52, %v160
    %v162 = vand.u32 %v161, 4294901760
    %v163 = vsub.f32 %v161, %v162
    %v164 = vand.u32 %v163, 4294901760
    %165 = vmatmul.mubr.f32.gmra.mxu0 %v164
    %v166 = vpop.f32.mrf.mxu0
    %v167 = vadd.f32 0.0, %v166
    %v168 = vpop.f32.mrf.mxu0
    %169 = vdwg.mxu0
    %170 = vmatprep.subr.mxu0 0.0
    %v171 = vand.u32 %v68, 4294901760
    %v172 = vsub.f32 %v68, %v171
    %v173 = vand.u32 %v172, 4294901760
    %v174 = vsub.f32 %v172, %v173
    %v175 = vand.u32 %v174, 4294901760
    %176 = vmatpush1.msra.mxu0 %v175
    %177 = vmatprep.subr.mxu0 0.0
    %v178 = vand.u32 %v67, 4294901760
    %v179 = vsub.f32 %v67, %v178
    %v180 = vand.u32 %v179, 4294901760
    %v181 = vsub.f32 %v179, %v180
    %v182 = vand.u32 %v181, 4294901760
    %183 = vmatpush1.msra.mxu0 %v182
    %184 = vmatprep.subr.mxu0 0.0
    %v185 = vand.u32 %v66, 4294901760
    %v186 = vsub.f32 %v66, %v185
    %v187 = vand.u32 %v186, 4294901760
    %v188 = vsub.f32 %v186, %v187
    %v189 = vand.u32 %v188, 4294901760
    %190 = vmatpush1.msra.mxu0 %v189
    %191 = vmatprep.subr.mxu0 0.0
    %v192 = vand.u32 %v65, 4294901760
    %v193 = vsub.f32 %v65, %v192
    %v194 = vand.u32 %v193, 4294901760
    %v195 = vsub.f32 %v193, %v194
    %v196 = vand.u32 %v195, 4294901760
    %197 = vmatpush1.msra.mxu0 %v196
    %198 = vmatprep.subr.mxu0 0.0
    %v199 = vand.u32 %v64, 4294901760
    %v200 = vsub.f32 %v64, %v199
    %v201 = vand.u32 %v200, 4294901760
    %v202 = vsub.f32 %v200, %v201
    %v203 = vand.u32 %v202, 4294901760
    %204 = vmatpush1.msra.mxu0 %v203
    %205 = vmatprep.subr.mxu0 0.0
    %v206 = vand.u32 %v63, 4294901760
    %v207 = vsub.f32 %v63, %v206
    %v208 = vand.u32 %v207, 4294901760
    %v209 = vsub.f32 %v207, %v208
    %v210 = vand.u32 %v209, 4294901760
    %211 = vmatpush1.msra.mxu0 %v210
    %212 = vmatprep.subr.mxu0 0.0
    %v213 = vand.u32 %v62, 4294901760
    %v214 = vsub.f32 %v62, %v213
    %v215 = vand.u32 %v214, 4294901760
    %v216 = vsub.f32 %v214, %v215
    %v217 = vand.u32 %v216, 4294901760
    %218 = vmatpush1.msra.mxu0 %v217
    %219 = vmatprep.subr.mxu0 0.0
    %v220 = vand.u32 %v61, 4294901760
    %v221 = vsub.f32 %v61, %v220
    %v222 = vand.u32 %v221, 4294901760
    %v223 = vsub.f32 %v221, %v222
    %v224 = vand.u32 %v223, 4294901760
    %225 = vmatpush1.msra.mxu0 %v224
    %226 = vmatprep.subr.mxu0 0.0
    %v227 = vand.u32 %v60, 4294901760
    %v228 = vsub.f32 %v60, %v227
    %v229 = vand.u32 %v228, 4294901760
    %v230 = vsub.f32 %v228, %v229
    %v231 = vand.u32 %v230, 4294901760
    %232 = vmatpush1.msra.mxu0 %v231
    %233 = vmatprep.subr.mxu0 0.0
    %v234 = vand.u32 %v59, 4294901760
    %v235 = vsub.f32 %v59, %v234
    %v236 = vand.u32 %v235, 4294901760
    %v237 = vsub.f32 %v235, %v236
    %v238 = vand.u32 %v237, 4294901760
    %239 = vmatpush1.msra.mxu0 %v238
    %240 = vmatprep.subr.mxu0 0.0
    %v241 = vand.u32 %v58, 4294901760
    %v242 = vsub.f32 %v58, %v241
    %v243 = vand.u32 %v242, 4294901760
    %v244 = vsub.f32 %v242, %v243
    %v245 = vand.u32 %v244, 4294901760
    %246 = vmatpush1.msra.mxu0 %v245
    %247 = vmatprep.subr.mxu0 0.0
    %v248 = vand.u32 %v57, 4294901760
    %v249 = vsub.f32 %v57, %v248
    %v250 = vand.u32 %v249, 4294901760
    %v251 = vsub.f32 %v249, %v250
    %v252 = vand.u32 %v251, 4294901760
    %253 = vmatpush1.msra.mxu0 %v252
    %254 = vmatprep.subr.mxu0 0.0
    %v255 = vand.u32 %v56, 4294901760
    %v256 = vsub.f32 %v56, %v255
    %v257 = vand.u32 %v256, 4294901760
    %v258 = vsub.f32 %v256, %v257
    %v259 = vand.u32 %v258, 4294901760
    %260 = vmatpush1.msra.mxu0 %v259
    %261 = vmatprep.subr.mxu0 0.0
    %v262 = vand.u32 %v55, 4294901760
    %v263 = vsub.f32 %v55, %v262
    %v264 = vand.u32 %v263, 4294901760
    %v265 = vsub.f32 %v263, %v264
    %v266 = vand.u32 %v265, 4294901760
    %267 = vmatpush1.msra.mxu0 %v266
    %268 = vmatprep.subr.mxu0 0.0
    %v269 = vand.u32 %v54, 4294901760
    %v270 = vsub.f32 %v54, %v269
    %v271 = vand.u32 %v270, 4294901760
    %v272 = vsub.f32 %v270, %v271
    %v273 = vand.u32 %v272, 4294901760
    %274 = vmatpush1.msra.mxu0 %v273
    %275 = vmatprep.subr.mxu0 0.0
    %v276 = vand.u32 %v53, 4294901760
    %v277 = vsub.f32 %v53, %v276
    %v278 = vand.u32 %v277, 4294901760
    %v279 = vsub.f32 %v277, %v278
    %v280 = vand.u32 %v279, 4294901760
    %281 = vmatpush1.msra.mxu0 %v280
    %282 = vmatprep.subr.mxu0 0.0
    %283 = vmatpush2.msra.mxu0 0.0
    %284 = vmatprep.subr.mxu0 0.0
    %285 = vmatpush2.msra.mxu0 0.0
    %286 = vmatprep.subr.mxu0 0.0
    %287 = vmatpush2.msra.mxu0 0.0
    %288 = vmatprep.subr.mxu0 0.0
    %289 = vmatpush2.msra.mxu0 0.0
    %290 = vmatprep.subr.mxu0 0.0
    %291 = vmatpush2.msra.mxu0 0.0
    %292 = vmatprep.subr.mxu0 0.0
    %293 = vmatpush2.msra.mxu0 0.0
    %294 = vmatprep.subr.mxu0 0.0
    %295 = vmatpush2.msra.mxu0 0.0
    %296 = vmatprep.subr.mxu0 0.0
    %297 = vmatpush2.msra.mxu0 0.0
    %298 = vmatprep.subr.mxu0 0.0
    %299 = vmatpush2.msra.mxu0 0.0
    %300 = vmatprep.subr.mxu0 0.0
    %301 = vmatpush2.msra.mxu0 0.0
    %302 = vmatprep.subr.mxu0 0.0
    %303 = vmatpush2.msra.mxu0 0.0
    %304 = vmatprep.subr.mxu0 0.0
    %305 = vmatpush2.msra.mxu0 0.0
    %306 = vmatprep.subr.mxu0 0.0
    %307 = vmatpush2.msra.mxu0 0.0
    %308 = vmatprep.subr.mxu0 0.0
    %309 = vmatpush2.msra.mxu0 0.0
    %310 = vmatprep.subr.mxu0 0.0
    %311 = vmatpush2.msra.mxu0 0.0
    %312 = vmatprep.subr.mxu0 0.0
    %313 = vmatpush2.msra.mxu0 0.0
    %314 = vmatprep.mubr.f32.mxu0 0.0
    %v315 = vand.u32 %v51, 4294901760
    %316 = vmatmul.mubr.f32.gmra.mxu0 %v315
    %v317 = vpop.f32.mrf.mxu0
    %v318 = vadd.f32 %v157, %v317
    %v319 = vpop.f32.mrf.mxu0
    %320 = vmatprep.mubr.f32.mxu0 0.0
    %v321 = vand.u32 %v52, 4294901760
    %322 = vmatmul.mubr.f32.gmra.mxu0 %v321
    %v323 = vpop.f32.mrf.mxu0
    %v324 = vadd.f32 %v167, %v323
    %v325 = vpop.f32.mrf.mxu0
    %326 = vdwg.mxu0
    %327 = vmatprep.subr.mxu0 0.0
    %v328 = vand.u32 %v68, 4294901760
    %v329 = vsub.f32 %v68, %v328
    %330 = vmatpush1.msra.mxu0 %v329
    %331 = vmatprep.subr.mxu0 0.0
    %v332 = vand.u32 %v67, 4294901760
    %v333 = vsub.f32 %v67, %v332
    %334 = vmatpush1.msra.mxu0 %v333
    %335 = vmatprep.subr.mxu0 0.0
    %v336 = vand.u32 %v66, 4294901760
    %v337 = vsub.f32 %v66, %v336
    %338 = vmatpush1.msra.mxu0 %v337
    %339 = vmatprep.subr.mxu0 0.0
    %v340 = vand.u32 %v65, 4294901760
    %v341 = vsub.f32 %v65, %v340
    %342 = vmatpush1.msra.mxu0 %v341
    %343 = vmatprep.subr.mxu0 0.0
    %v344 = vand.u32 %v64, 4294901760
    %v345 = vsub.f32 %v64, %v344
    %346 = vmatpush1.msra.mxu0 %v345
    %347 = vmatprep.subr.mxu0 0.0
    %v348 = vand.u32 %v63, 4294901760
    %v349 = vsub.f32 %v63, %v348
    %350 = vmatpush1.msra.mxu0 %v349
    %351 = vmatprep.subr.mxu0 0.0
    %v352 = vand.u32 %v62, 4294901760
    %v353 = vsub.f32 %v62, %v352
    %354 = vmatpush1.msra.mxu0 %v353
    %355 = vmatprep.subr.mxu0 0.0
    %v356 = vand.u32 %v61, 4294901760
    %v357 = vsub.f32 %v61, %v356
    %358 = vmatpush1.msra.mxu0 %v357
    %359 = vmatprep.subr.mxu0 0.0
    %v360 = vand.u32 %v60, 4294901760
    %v361 = vsub.f32 %v60, %v360
    %362 = vmatpush1.msra.mxu0 %v361
    %363 = vmatprep.subr.mxu0 0.0
    %v364 = vand.u32 %v59, 4294901760
    %v365 = vsub.f32 %v59, %v364
    %366 = vmatpush1.msra.mxu0 %v365
    %367 = vmatprep.subr.mxu0 0.0
    %v368 = vand.u32 %v58, 4294901760
    %v369 = vsub.f32 %v58, %v368
    %370 = vmatpush1.msra.mxu0 %v369
    %371 = vmatprep.subr.mxu0 0.0
    %v372 = vand.u32 %v57, 4294901760
    %v373 = vsub.f32 %v57, %v372
    %374 = vmatpush1.msra.mxu0 %v373
    %375 = vmatprep.subr.mxu0 0.0
    %v376 = vand.u32 %v56, 4294901760
    %v377 = vsub.f32 %v56, %v376
    %378 = vmatpush1.msra.mxu0 %v377
    %379 = vmatprep.subr.mxu0 0.0
    %v380 = vand.u32 %v55, 4294901760
    %v381 = vsub.f32 %v55, %v380
    %382 = vmatpush1.msra.mxu0 %v381
    %383 = vmatprep.subr.mxu0 0.0
    %v384 = vand.u32 %v54, 4294901760
    %v385 = vsub.f32 %v54, %v384
    %386 = vmatpush1.msra.mxu0 %v385
    %387 = vmatprep.subr.mxu0 0.0
    %v388 = vand.u32 %v53, 4294901760
    %v389 = vsub.f32 %v53, %v388
    %390 = vmatpush1.msra.mxu0 %v389
    %391 = vmatprep.subr.mxu0 0.0
    %392 = vmatpush2.msra.mxu0 0.0
    %393 = vmatprep.subr.mxu0 0.0
    %394 = vmatpush2.msra.mxu0 0.0
    %395 = vmatprep.subr.mxu0 0.0
    %396 = vmatpush2.msra.mxu0 0.0
    %397 = vmatprep.subr.mxu0 0.0
    %398 = vmatpush2.msra.mxu0 0.0
    %399 = vmatprep.subr.mxu0 0.0
    %400 = vmatpush2.msra.mxu0 0.0
    %401 = vmatprep.subr.mxu0 0.0
    %402 = vmatpush2.msra.mxu0 0.0
    %403 = vmatprep.subr.mxu0 0.0
    %404 = vmatpush2.msra.mxu0 0.0
    %405 = vmatprep.subr.mxu0 0.0
    %406 = vmatpush2.msra.mxu0 0.0
    %407 = vmatprep.subr.mxu0 0.0
    %408 = vmatpush2.msra.mxu0 0.0
    %409 = vmatprep.subr.mxu0 0.0
    %410 = vmatpush2.msra.mxu0 0.0
    %411 = vmatprep.subr.mxu0 0.0
    %412 = vmatpush2.msra.mxu0 0.0
    %413 = vmatprep.subr.mxu0 0.0
    %414 = vmatpush2.msra.mxu0 0.0
    %415 = vmatprep.subr.mxu0 0.0
    %416 = vmatpush2.msra.mxu0 0.0
    %417 = vmatprep.subr.mxu0 0.0
    %418 = vmatpush2.msra.mxu0 0.0
    %419 = vmatprep.subr.mxu0 0.0
    %420 = vmatpush2.msra.mxu0 0.0
    %421 = vmatprep.subr.mxu0 0.0
    %422 = vmatpush2.msra.mxu0 0.0
    %423 = vmatprep.mubr.f32.mxu0 0.0
    %v424 = vand.u32 %v51, 4294901760
    %v425 = vsub.f32 %v51, %v424
    %426 = vmatmul.mubr.f32.gmra.mxu0 %v425
    %v427 = vpop.f32.mrf.mxu0
    %v428 = vadd.f32 %v318, %v427
    %v429 = vpop.f32.mrf.mxu0
    %430 = vmatprep.mubr.f32.mxu0 0.0
    %v431 = vand.u32 %v52, 4294901760
    %v432 = vsub.f32 %v52, %v431
    %433 = vmatmul.mubr.f32.gmra.mxu0 %v432
    %v434 = vpop.f32.mrf.mxu0
    %v435 = vadd.f32 %v324, %v434
    %v436 = vpop.f32.mrf.mxu0
    %437 = vdwg.mxu0
    %438 = vmatprep.subr.mxu0 0.0
    %v439 = vand.u32 %v68, 4294901760
    %440 = vmatpush1.msra.mxu0 %v439
    %441 = vmatprep.subr.mxu0 0.0
    %v442 = vand.u32 %v67, 4294901760
    %443 = vmatpush1.msra.mxu0 %v442
    %444 = vmatprep.subr.mxu0 0.0
    %v445 = vand.u32 %v66, 4294901760
    %446 = vmatpush1.msra.mxu0 %v445
    %447 = vmatprep.subr.mxu0 0.0
    %v448 = vand.u32 %v65, 4294901760
    %449 = vmatpush1.msra.mxu0 %v448
    %450 = vmatprep.subr.mxu0 0.0
    %v451 = vand.u32 %v64, 4294901760
    %452 = vmatpush1.msra.mxu0 %v451
    %453 = vmatprep.subr.mxu0 0.0
    %v454 = vand.u32 %v63, 4294901760
    %455 = vmatpush1.msra.mxu0 %v454
    %456 = vmatprep.subr.mxu0 0.0
    %v457 = vand.u32 %v62, 4294901760
    %458 = vmatpush1.msra.mxu0 %v457
    %459 = vmatprep.subr.mxu0 0.0
    %v460 = vand.u32 %v61, 4294901760
    %461 = vmatpush1.msra.mxu0 %v460
    %462 = vmatprep.subr.mxu0 0.0
    %v463 = vand.u32 %v60, 4294901760
    %464 = vmatpush1.msra.mxu0 %v463
    %465 = vmatprep.subr.mxu0 0.0
    %v466 = vand.u32 %v59, 4294901760
    %467 = vmatpush1.msra.mxu0 %v466
    %468 = vmatprep.subr.mxu0 0.0
    %v469 = vand.u32 %v58, 4294901760
    %470 = vmatpush1.msra.mxu0 %v469
    %471 = vmatprep.subr.mxu0 0.0
    %v472 = vand.u32 %v57, 4294901760
    %473 = vmatpush1.msra.mxu0 %v472
    %474 = vmatprep.subr.mxu0 0.0
    %v475 = vand.u32 %v56, 4294901760
    %476 = vmatpush1.msra.mxu0 %v475
    %477 = vmatprep.subr.mxu0 0.0
    %v478 = vand.u32 %v55, 4294901760
    %479 = vmatpush1.msra.mxu0 %v478
    %480 = vmatprep.subr.mxu0 0.0
    %v481 = vand.u32 %v54, 4294901760
    %482 = vmatpush1.msra.mxu0 %v481
    %483 = vmatprep.subr.mxu0 0.0
    %v484 = vand.u32 %v53, 4294901760
    %485 = vmatpush1.msra.mxu0 %v484
    %486 = vmatprep.subr.mxu0 0.0
    %487 = vmatpush2.msra.mxu0 0.0
    %488 = vmatprep.subr.mxu0 0.0
    %489 = vmatpush2.msra.mxu0 0.0
    %490 = vmatprep.subr.mxu0 0.0
    %491 = vmatpush2.msra.mxu0 0.0
    %492 = vmatprep.subr.mxu0 0.0
    %493 = vmatpush2.msra.mxu0 0.0
    %494 = vmatprep.subr.mxu0 0.0
    %495 = vmatpush2.msra.mxu0 0.0
    %496 = vmatprep.subr.mxu0 0.0
    %497 = vmatpush2.msra.mxu0 0.0
    %498 = vmatprep.subr.mxu0 0.0
    %499 = vmatpush2.msra.mxu0 0.0
    %500 = vmatprep.subr.mxu0 0.0
    %501 = vmatpush2.msra.mxu0 0.0
    %502 = vmatprep.subr.mxu0 0.0
    %503 = vmatpush2.msra.mxu0 0.0
    %504 = vmatprep.subr.mxu0 0.0
    %505 = vmatpush2.msra.mxu0 0.0
    %506 = vmatprep.subr.mxu0 0.0
    %507 = vmatpush2.msra.mxu0 0.0
    %508 = vmatprep.subr.mxu0 0.0
    %509 = vmatpush2.msra.mxu0 0.0
    %510 = vmatprep.subr.mxu0 0.0
    %511 = vmatpush2.msra.mxu0 0.0
    %512 = vmatprep.subr.mxu0 0.0
    %513 = vmatpush2.msra.mxu0 0.0
    %514 = vmatprep.subr.mxu0 0.0
    %515 = vmatpush2.msra.mxu0 0.0
    %516 = vmatprep.subr.mxu0 0.0
    %517 = vmatpush2.msra.mxu0 0.0
    %518 = vmatprep.mubr.f32.mxu0 0.0
    %v519 = vand.u32 %v51, 4294901760
    %v520 = vsub.f32 %v51, %v519
    %v521 = vand.u32 %v520, 4294901760
    %522 = vmatmul.mubr.f32.gmra.mxu0 %v521
    %v523 = vpop.f32.mrf.mxu0
    %v524 = vadd.f32 %v428, %v523
    %v525 = vpop.f32.mrf.mxu0
    %526 = vmatprep.mubr.f32.mxu0 0.0
    %v527 = vand.u32 %v52, 4294901760
    %v528 = vsub.f32 %v52, %v527
    %v529 = vand.u32 %v528, 4294901760
    %530 = vmatmul.mubr.f32.gmra.mxu0 %v529
    %v531 = vpop.f32.mrf.mxu0
    %v532 = vadd.f32 %v435, %v531
    %v533 = vpop.f32.mrf.mxu0
    %534 = vdwg.mxu0
    %535 = vmatprep.subr.mxu0 0.0
    %v536 = vand.u32 %v68, 4294901760
    %v537 = vsub.f32 %v68, %v536
    %v538 = vand.u32 %v537, 4294901760
    %539 = vmatpush1.msra.mxu0 %v538
    %540 = vmatprep.subr.mxu0 0.0
    %v541 = vand.u32 %v67, 4294901760
    %v542 = vsub.f32 %v67, %v541
    %v543 = vand.u32 %v542, 4294901760
    %544 = vmatpush1.msra.mxu0 %v543
    %545 = vmatprep.subr.mxu0 0.0
    %v546 = vand.u32 %v66, 4294901760
    %v547 = vsub.f32 %v66, %v546
    %v548 = vand.u32 %v547, 4294901760
    %549 = vmatpush1.msra.mxu0 %v548
    %550 = vmatprep.subr.mxu0 0.0
    %v551 = vand.u32 %v65, 4294901760
    %v552 = vsub.f32 %v65, %v551
    %v553 = vand.u32 %v552, 4294901760
    %554 = vmatpush1.msra.mxu0 %v553
    %555 = vmatprep.subr.mxu0 0.0
    %v556 = vand.u32 %v64, 4294901760
    %v557 = vsub.f32 %v64, %v556
    %v558 = vand.u32 %v557, 4294901760
    %559 = vmatpush1.msra.mxu0 %v558
    %560 = vmatprep.subr.mxu0 0.0
    %v561 = vand.u32 %v63, 4294901760
    %v562 = vsub.f32 %v63, %v561
    %v563 = vand.u32 %v562, 4294901760
    %564 = vmatpush1.msra.mxu0 %v563
    %565 = vmatprep.subr.mxu0 0.0
    %v566 = vand.u32 %v62, 4294901760
    %v567 = vsub.f32 %v62, %v566
    %v568 = vand.u32 %v567, 4294901760
    %569 = vmatpush1.msra.mxu0 %v568
    %570 = vmatprep.subr.mxu0 0.0
    %v571 = vand.u32 %v61, 4294901760
    %v572 = vsub.f32 %v61, %v571
    %v573 = vand.u32 %v572, 4294901760
    %574 = vmatpush1.msra.mxu0 %v573
    %575 = vmatprep.subr.mxu0 0.0
    %v576 = vand.u32 %v60, 4294901760
    %v577 = vsub.f32 %v60, %v576
    %v578 = vand.u32 %v577, 4294901760
    %579 = vmatpush1.msra.mxu0 %v578
    %580 = vmatprep.subr.mxu0 0.0
    %v581 = vand.u32 %v59, 4294901760
    %v582 = vsub.f32 %v59, %v581
    %v583 = vand.u32 %v582, 4294901760
    %584 = vmatpush1.msra.mxu0 %v583
    %585 = vmatprep.subr.mxu0 0.0
    %v586 = vand.u32 %v58, 4294901760
    %v587 = vsub.f32 %v58, %v586
    %v588 = vand.u32 %v587, 4294901760
    %589 = vmatpush1.msra.mxu0 %v588
    %590 = vmatprep.subr.mxu0 0.0
    %v591 = vand.u32 %v57, 4294901760
    %v592 = vsub.f32 %v57, %v591
    %v593 = vand.u32 %v592, 4294901760
    %594 = vmatpush1.msra.mxu0 %v593
    %595 = vmatprep.subr.mxu0 0.0
    %v596 = vand.u32 %v56, 4294901760
    %v597 = vsub.f32 %v56, %v596
    %v598 = vand.u32 %v597, 4294901760
    %599 = vmatpush1.msra.mxu0 %v598
    %600 = vmatprep.subr.mxu0 0.0
    %v601 = vand.u32 %v55, 4294901760
    %v602 = vsub.f32 %v55, %v601
    %v603 = vand.u32 %v602, 4294901760
    %604 = vmatpush1.msra.mxu0 %v603
    %605 = vmatprep.subr.mxu0 0.0
    %v606 = vand.u32 %v54, 4294901760
    %v607 = vsub.f32 %v54, %v606
    %v608 = vand.u32 %v607, 4294901760
    %609 = vmatpush1.msra.mxu0 %v608
    %610 = vmatprep.subr.mxu0 0.0
    %v611 = vand.u32 %v53, 4294901760
    %v612 = vsub.f32 %v53, %v611
    %v613 = vand.u32 %v612, 4294901760
    %614 = vmatpush1.msra.mxu0 %v613
    %615 = vmatprep.subr.mxu0 0.0
    %616 = vmatpush2.msra.mxu0 0.0
    %617 = vmatprep.subr.mxu0 0.0
    %618 = vmatpush2.msra.mxu0 0.0
    %619 = vmatprep.subr.mxu0 0.0
    %620 = vmatpush2.msra.mxu0 0.0
    %621 = vmatprep.subr.mxu0 0.0
    %622 = vmatpush2.msra.mxu0 0.0
    %623 = vmatprep.subr.mxu0 0.0
    %624 = vmatpush2.msra.mxu0 0.0
    %625 = vmatprep.subr.mxu0 0.0
    %626 = vmatpush2.msra.mxu0 0.0
    %627 = vmatprep.subr.mxu0 0.0
    %628 = vmatpush2.msra.mxu0 0.0
    %629 = vmatprep.subr.mxu0 0.0
    %630 = vmatpush2.msra.mxu0 0.0
    %631 = vmatprep.subr.mxu0 0.0
    %632 = vmatpush2.msra.mxu0 0.0
    %633 = vmatprep.subr.mxu0 0.0
    %634 = vmatpush2.msra.mxu0 0.0
    %635 = vmatprep.subr.mxu0 0.0
    %636 = vmatpush2.msra.mxu0 0.0
    %637 = vmatprep.subr.mxu0 0.0
    %638 = vmatpush2.msra.mxu0 0.0
    %639 = vmatprep.subr.mxu0 0.0
    %640 = vmatpush2.msra.mxu0 0.0
    %641 = vmatprep.subr.mxu0 0.0
    %642 = vmatpush2.msra.mxu0 0.0
    %643 = vmatprep.subr.mxu0 0.0
    %644 = vmatpush2.msra.mxu0 0.0
    %645 = vmatprep.subr.mxu0 0.0
    %646 = vmatpush2.msra.mxu0 0.0
    %647 = vmatprep.mubr.f32.mxu0 0.0
    %v648 = vand.u32 %v51, 4294901760
    %649 = vmatmul.mubr.f32.gmra.mxu0 %v648
    %v650 = vpop.f32.mrf.mxu0
    %v651 = vadd.f32 %v524, %v650
    %v652 = vpop.f32.mrf.mxu0
    %653 = vmatprep.mubr.f32.mxu0 0.0
    %v654 = vand.u32 %v52, 4294901760
    %655 = vmatmul.mubr.f32.gmra.mxu0 %v654
    %v656 = vpop.f32.mrf.mxu0
    %v657 = vadd.f32 %v532, %v656
    %v658 = vpop.f32.mrf.mxu0
    %659 = vdwg.mxu0
    %660 = vmatprep.subr.mxu0 0.0
    %v661 = vand.u32 %v68, 4294901760
    %662 = vmatpush1.msra.mxu0 %v661
    %663 = vmatprep.subr.mxu0 0.0
    %v664 = vand.u32 %v67, 4294901760
    %665 = vmatpush1.msra.mxu0 %v664
    %666 = vmatprep.subr.mxu0 0.0
    %v667 = vand.u32 %v66, 4294901760
    %668 = vmatpush1.msra.mxu0 %v667
    %669 = vmatprep.subr.mxu0 0.0
    %v670 = vand.u32 %v65, 4294901760
    %671 = vmatpush1.msra.mxu0 %v670
    %672 = vmatprep.subr.mxu0 0.0
    %v673 = vand.u32 %v64, 4294901760
    %674 = vmatpush1.msra.mxu0 %v673
    %675 = vmatprep.subr.mxu0 0.0
    %v676 = vand.u32 %v63, 4294901760
    %677 = vmatpush1.msra.mxu0 %v676
    %678 = vmatprep.subr.mxu0 0.0
    %v679 = vand.u32 %v62, 4294901760
    %680 = vmatpush1.msra.mxu0 %v679
    %681 = vmatprep.subr.mxu0 0.0
    %v682 = vand.u32 %v61, 4294901760
    %683 = vmatpush1.msra.mxu0 %v682
    %684 = vmatprep.subr.mxu0 0.0
    %v685 = vand.u32 %v60, 4294901760
    %686 = vmatpush1.msra.mxu0 %v685
    %687 = vmatprep.subr.mxu0 0.0
    %v688 = vand.u32 %v59, 4294901760
    %689 = vmatpush1.msra.mxu0 %v688
    %690 = vmatprep.subr.mxu0 0.0
    %v691 = vand.u32 %v58, 4294901760
    %692 = vmatpush1.msra.mxu0 %v691
    %693 = vmatprep.subr.mxu0 0.0
    %v694 = vand.u32 %v57, 4294901760
    %695 = vmatpush1.msra.mxu0 %v694
    %696 = vmatprep.subr.mxu0 0.0
    %v697 = vand.u32 %v56, 4294901760
    %698 = vmatpush1.msra.mxu0 %v697
    %699 = vmatprep.subr.mxu0 0.0
    %v700 = vand.u32 %v55, 4294901760
    %701 = vmatpush1.msra.mxu0 %v700
    %702 = vmatprep.subr.mxu0 0.0
    %v703 = vand.u32 %v54, 4294901760
    %704 = vmatpush1.msra.mxu0 %v703
    %705 = vmatprep.subr.mxu0 0.0
    %v706 = vand.u32 %v53, 4294901760
    %707 = vmatpush1.msra.mxu0 %v706
    %708 = vmatprep.subr.mxu0 0.0
    %709 = vmatpush2.msra.mxu0 0.0
    %710 = vmatprep.subr.mxu0 0.0
    %711 = vmatpush2.msra.mxu0 0.0
    %712 = vmatprep.subr.mxu0 0.0
    %713 = vmatpush2.msra.mxu0 0.0
    %714 = vmatprep.subr.mxu0 0.0
    %715 = vmatpush2.msra.mxu0 0.0
    %716 = vmatprep.subr.mxu0 0.0
    %717 = vmatpush2.msra.mxu0 0.0
    %718 = vmatprep.subr.mxu0 0.0
    %719 = vmatpush2.msra.mxu0 0.0
    %720 = vmatprep.subr.mxu0 0.0
    %721 = vmatpush2.msra.mxu0 0.0
    %722 = vmatprep.subr.mxu0 0.0
    %723 = vmatpush2.msra.mxu0 0.0
    %724 = vmatprep.subr.mxu0 0.0
    %725 = vmatpush2.msra.mxu0 0.0
    %726 = vmatprep.subr.mxu0 0.0
    %727 = vmatpush2.msra.mxu0 0.0
    %728 = vmatprep.subr.mxu0 0.0
    %729 = vmatpush2.msra.mxu0 0.0
    %730 = vmatprep.subr.mxu0 0.0
    %731 = vmatpush2.msra.mxu0 0.0
    %732 = vmatprep.subr.mxu0 0.0
    %733 = vmatpush2.msra.mxu0 0.0
    %734 = vmatprep.subr.mxu0 0.0
    %735 = vmatpush2.msra.mxu0 0.0
    %736 = vmatprep.subr.mxu0 0.0
    %737 = vmatpush2.msra.mxu0 0.0
    %738 = vmatprep.subr.mxu0 0.0
    %739 = vmatpush2.msra.mxu0 0.0
    %740 = vmatprep.mubr.f32.mxu0 0.0
    %v741 = vand.u32 %v51, 4294901760
    %742 = vmatmul.mubr.f32.gmra.mxu0 %v741
    %v743 = vpop.f32.mrf.mxu0
    %v744 = vadd.f32 %v651, %v743
    %v745 = vpop.f32.mrf.mxu0
    %746 = vmatprep.mubr.f32.mxu0 0.0
    %v747 = vand.u32 %v52, 4294901760
    %748 = vmatmul.mubr.f32.gmra.mxu0 %v747
    %v749 = vpop.f32.mrf.mxu0
    %v750 = vadd.f32 %v657, %v749
    %v751 = vpop.f32.mrf.mxu0
    %752 = vdwg.mxu0
    %vm753 = vcmask 687104
    %754 = vst.msk [vmem:[#allocation3] sm:$0xff] %vm753, %v744
    %755 = vst.msk [vmem:[#allocation3 + $0x8] sm:$0xff] %vm753, %v750
    // Predicated region
    $region48: #{tpu_custom_call.1} parent=1 // pred_check
      _
    $region49: #{tpu_custom_call.1} parent=1 // pred_check_branch
      %757 = sbr.rel (0) target = $region51
    $region50: #{tpu_custom_call.1} parent=1 // pred_region
      %s759 = ssub.s32 256, 256
      %760 = vsyncadd [#allocation4], %s759
      %s761 = sshll.u32 [#allocation3], 4
      %s762 = int_to_ptr.vmem [resolvable:$true] %s761
      %767 = dma.vmem_to_hbm [thread:$0]  %s762, 256, %s2, [#allocation4], 128, 128, 8
    $region51: #{tpu_custom_call.1} parent=1 // pred_fallthru
      _
    // Predicated region
    $region52: #{tpu_custom_call.1} parent=1 // pred_check
      _
    $region53: #{tpu_custom_call.1} parent=1 // pred_check_branch
      %769 = sbr.rel (0) target = $region55
    $region54: #{tpu_custom_call.1} parent=1 // pred_region
      %770 = dma.done [#allocation4], 256
    $region55: #{tpu_custom_call.1} parent=1 // pred_fallthru
      _
    %771 = vsyncpa [#allocation4], 1

</llo_original>
